<compile_context>
chip_gen: v5e
topology: v5e:2x2
jax: 0.10.0
libtpu: 0.0.40
codegen_flags: <defaults>
</compile_context>

<pallas_src>
import functools
import math

import jax
import jax.numpy as jnp
from jax import lax
from jax.experimental import pallas as pl
from jax.experimental.pallas import tpu as pltpu


def _attn_kernel(x_ref, mrow_ref, mcol_ref, w_ref, b_ref, o_ref, *, inv_sqrt_d):
    """One grid step: TB batch elements of node->node attention.

    x_ref:    (TB, N, D)   bf16  node features
    mrow_ref: (TB, 1, N)   f32   node mask, row layout (1 = real node)
    mcol_ref: (TB, N, 1)   f32   node mask, column layout
    w_ref:    (D, 3D)      bf16  fused [Wq | Wk | Wv]  (x @ W layout)
    b_ref:    (1, 3D)      f32   fused [bq | bk | bv]
    o_ref:    (TB, N, D)   f32
    """
    tb, n, d = x_ref.shape

    # Fused QKV projection: one wide MXU matmul over all TB*N rows (bf16 in,
    # f32 accumulation), then bias add in f32.
    x2 = x_ref[...].reshape(tb * n, d)
    qkv = jnp.dot(x2, w_ref[...],
                  preferred_element_type=jnp.float32) + b_ref[...]   # (TB*N, 3D)

    # Fold the 1/sqrt(d) attention scale into q.
    q = (qkv[:, :d] * inv_sqrt_d).reshape(tb, n, d)
    k = qkv[:, d:2 * d].reshape(tb, n, d)
    v = qkv[:, 2 * d:].reshape(tb, n, d)

    # scores[b, i, j] = q[b, i, :] . k[b, j, :]  (contract last dims, batch
    # dim 0; no explicit k transpose materialized).
    scores = lax.dot_general(
        q, k,
        dimension_numbers=(((2,), (2,)), ((0,), (0,))),
        preferred_element_type=jnp.float32)                # (TB, N, N)

    # Additive key-side mask: ~-1e9 on padded key columns (cheaper than select).
    mrow = mrow_ref[...]                                   # (TB, 1, N)
    scores = scores + (mrow - 1.0) * 1e9

    # Numerically stable softmax, all in f32.
    s_max = jnp.max(scores, axis=-1, keepdims=True)
    p = jnp.exp(scores - s_max)
    p = p * pl.reciprocal(jnp.sum(p, axis=-1, keepdims=True), approx=True)

    # P @ V on the MXU with bf16 operands, f32 accumulation.
    out = jnp.einsum('bqk,bkd->bqd',
                     p.astype(jnp.bfloat16), v.astype(jnp.bfloat16),
                     preferred_element_type=jnp.float32)   # (TB, N, D)

    # Zero padded query rows (matches `Att @ V * x_mask` in the reference).
    o_ref[...] = (out * mcol_ref[...]).astype(o_ref.dtype)


def _pick_block_b(B, N, D, vmem_budget_bytes=6 << 20):
    """Batch-tile size: as many batch elements per step as a modest VMEM budget
    allows (keeps us inside default scoped VMEM on v5e/v7x), targeting >=512
    projection rows per step to fill the MXU."""
    per_b = (2 * N * D * 2        # x block, bf16, double-buffered
             + 2 * N * D * 4      # out block, f32, double-buffered
             + N * 3 * D * 4      # fused qkv
             + 3 * N * D * 4      # q, k, v
             + 2 * N * N * 4      # scores + p
             + 2 * 2 * N * 4)     # row + column masks, double-buffered
    tb = max(1, min(B,
                    max(1, 512 // max(N, 1)),
                    max(1, vmem_budget_bytes // max(per_b, 1))))
    while B % tb:
        tb -= 1
    return tb


def attention_node_to_node(x, e, node_mask, params, *, block_b=None):
    """Pallas implementation of attention_node_to_node.forward.

    x:         (B, N, D) float32
    e:         arbitrary edge tensor, passed through unchanged
    node_mask: (B, N) float in {0, 1}
    params:    dict with wq/wk/wv (D, D) and bq/bk/bv (D,)
    Returns (x_out, e) with x_out shape (B, N, D) float32.
    """
    B, N, D = x.shape
    out_dtype = x.dtype
    inv_sqrt_d = 1.0 / math.sqrt(D)

    # Pad N up to a sublane multiple; padded nodes get mask=0 and are sliced off.
    n_pad = ((N + 7) // 8) * 8
    if n_pad != N:
        x = jnp.pad(x, ((0, 0), (0, n_pad - N), (0, 0)))
        node_mask = jnp.pad(node_mask, ((0, 0), (0, n_pad - N)))

    # Fused projection: x @ [Wq | Wk | Wv] + [bq | bk | bv]; bf16 MXU operands.
    w_qkv = jnp.concatenate(
        [params["wq"], params["wk"], params["wv"]], axis=1).astype(jnp.bfloat16)
    b_qkv = jnp.concatenate(
        [params["bq"], params["bk"], params["bv"]]).reshape(1, 3 * D).astype(jnp.float32)

    x_bf16 = x.astype(jnp.bfloat16)
    mask_f32 = node_mask.astype(jnp.float32)
    mask_row = mask_f32.reshape(B, 1, n_pad)   # lane-dense, key-side bias
    mask_col = mask_f32.reshape(B, n_pad, 1)   # query-row zeroing (no in-kernel transpose)

    tb = _pick_block_b(B, n_pad, D) if block_b is None else block_b
    assert B % tb == 0, "block_b must divide B"

    kernel = functools.partial(_attn_kernel, inv_sqrt_d=inv_sqrt_d)
    const = lambda b: (0, 0)   # weights/biases: resident, same block every step

    x_out = pl.pallas_call(
        kernel,
        out_shape=jax.ShapeDtypeStruct((B, n_pad, D), out_dtype),
        grid_spec=pltpu.PrefetchScalarGridSpec(
            num_scalar_prefetch=0,
            grid=(B // tb,),
            in_specs=[
                pl.BlockSpec((tb, n_pad, D), lambda b: (b, 0, 0)),   # x
                pl.BlockSpec((tb, 1, n_pad), lambda b: (b, 0, 0)),   # mask (row)
                pl.BlockSpec((tb, n_pad, 1), lambda b: (b, 0, 0)),   # mask (col)
                pl.BlockSpec((D, 3 * D), const),                     # fused W
                pl.BlockSpec((1, 3 * D), const),                     # fused b
            ],
            out_specs=pl.BlockSpec((tb, n_pad, D), lambda b: (b, 0, 0)),
        ),
        compiler_params=pltpu.CompilerParams(
            dimension_semantics=("parallel",)),
    )(x_bf16, mask_row, mask_col, w_qkv, b_qkv)

    if n_pad != N:
        x_out = x_out[:, :N, :]
    return x_out, e


def init_params(key, d_head):
    """Deterministic init mimicking nn.Linear default (uniform +/- 1/sqrt(in))."""
    ks = jax.random.split(key, 6)
    bound = 1.0 / math.sqrt(d_head)
    u = lambda k, shape: jax.random.uniform(
        k, shape, jnp.float32, minval=-bound, maxval=bound)
    return {
        "wq": u(ks[0], (d_head, d_head)), "bq": u(ks[1], (d_head,)),
        "wk": u(ks[2], (d_head, d_head)), "bk": u(ks[3], (d_head,)),
        "wv": u(ks[4], (d_head, d_head)), "bv": u(ks[5], (d_head,)),
    }


def _reference(x, node_mask, params):
    """Plain-JAX reference mirroring the PyTorch forward.  MXU inputs (x, W)
    are quantized to bf16 to match the kernel's operand precision."""
    qf = lambda a: a.astype(jnp.bfloat16).astype(jnp.float32)
    D = x.shape[-1]
    xq = qf(x)
    m = node_mask[..., None]
    q = (xq @ qf(params["wq"]) + params["bq"]) * m
    k = (xq @ qf(params["wk"]) + params["bk"]) * m
    v = (xq @ qf(params["wv"]) + params["bv"]) * m
    att = jnp.einsum("bid,bjd->bij", q, k) / jnp.sqrt(jnp.float32(D))
    att_mask = node_mask[:, None, :] * node_mask[:, :, None]
    att = jnp.where(att_mask > 0, att, -1e9)
    att = jax.nn.softmax(att, axis=-1)
    return jnp.einsum("bij,bjd->bid", att, v) * m


if __name__ == "__main__":
    B, N, D = 2, 8, 32          # batch, num_nodes, d_head

    key = jax.random.PRNGKey(0)
    k_x, k_m, k_p, k_e = jax.random.split(key, 4)

    x = jax.random.normal(k_x, (B, N, D), dtype=jnp.float32)
    # node mask: last 2 nodes of batch 1 are padding
    node_mask = jnp.ones((B, N), dtype=jnp.float32)
    node_mask = node_mask.at[1, -2:].set(0.0)
    e = jax.random.normal(k_e, (B, N, N, 4), dtype=jnp.float32)  # passed through

    params = init_params(k_p, D)

    x_out, e_out = attention_node_to_node(x, e, node_mask, params)
    x_out = jax.block_until_ready(x_out)

    # Sanity-check against a plain-JAX reference.  bf16 PV operands + approx
    # reciprocal introduce small numerical differences -> loosened tolerance.
    x_ref = _reference(x, node_mask, params)
    assert x_out.shape == (B, N, D)
    assert jnp.allclose(x_out, x_ref, atol=3e-2, rtol=3e-2), "mismatch vs reference"
    # padded rows must be exactly zero
    assert jnp.all(x_out[1, -2:, :] == 0.0)
    assert (e_out == e).all()

    print("KERNEL_OK")
</pallas_src>

<mosaic_0001>
module attributes {stable_mosaic.version = 11 : i64} {
  func.func @_attn_kernel(%arg0: i32, %arg1: memref<2x8x32xbf16, #tpu.memory_space<vmem>>, %arg2: memref<2x1x8xf32, #tpu.memory_space<vmem>>, %arg3: memref<2x8x1xf32, #tpu.memory_space<vmem>>, %arg4: memref<32x96xbf16, #tpu.memory_space<vmem>>, %arg5: memref<1x96xf32, #tpu.memory_space<vmem>>, %arg6: memref<2x8x32xf32, #tpu.memory_space<vmem>>) attributes {dimension_semantics = [#tpu.dimension_semantics<parallel>], iteration_bounds = array<i64: 1>, scalar_prefetch = 0 : i64, scratch_operands = 0 : i64, tpu.core_type = #tpu.core_type<tc>, window_params = [{transform_indices = @transform_0, window_bounds = array<i64: 2, 8, 32>}, {transform_indices = @transform_1, window_bounds = array<i64: 2, 1, 8>}, {transform_indices = @transform_2, window_bounds = array<i64: 2, 8, 1>}, {pipeline_mode = #tpu.pipeline_mode<synchronous>, transform_indices = @transform_3, window_bounds = array<i64: 32, 96>}, {pipeline_mode = #tpu.pipeline_mode<synchronous>, transform_indices = @transform_4, window_bounds = array<i64: 1, 96>}, {transform_indices = @transform_5, window_bounds = array<i64: 2, 8, 32>}]} {
    %c0 = arith.constant 0 : index
    %c0_0 = arith.constant 0 : index
    %c0_1 = arith.constant 0 : index
    %0 = vector.load %arg1[%c0, %c0_0, %c0_1] : memref<2x8x32xbf16, #tpu.memory_space<vmem>>, vector<2x8x32xbf16>
    %1 = vector.shape_cast %0 : vector<2x8x32xbf16> to vector<16x32xbf16>
    %c0_2 = arith.constant 0 : index
    %c0_3 = arith.constant 0 : index
    %2 = vector.load %arg4[%c0_2, %c0_3] : memref<32x96xbf16, #tpu.memory_space<vmem>>, vector<32x96xbf16>
    %cst = arith.constant dense<0.000000e+00> : vector<16x96xf32>
    %3 = tpu.matmul %1, %2, %cst {dimension_numbers = #tpu.dot_dimension_numbers<[1], [0], [0], [1], [0, 0, 1, 1], [], []>} : vector<16x32xbf16>, vector<32x96xbf16>, vector<16x96xf32> -> vector<16x96xf32>
    %c0_4 = arith.constant 0 : index
    %c0_5 = arith.constant 0 : index
    %4 = vector.load %arg5[%c0_4, %c0_5] : memref<1x96xf32, #tpu.memory_space<vmem>>, vector<1x96xf32>
    %5 = vector.broadcast %4 : vector<1x96xf32> to vector<16x96xf32>
    %6 = arith.addf %3, %5 : vector<16x96xf32>
    %7 = vector.extract_strided_slice %6 {offsets = [0, 0], sizes = [16, 32], strides = [1, 1]} : vector<16x96xf32> to vector<16x32xf32>
    %cst_6 = arith.constant 0.176776692 : f32
    %8 = vector.broadcast %cst_6 : f32 to vector<16x32xf32>
    %9 = arith.mulf %7, %8 : vector<16x32xf32>
    %10 = vector.shape_cast %9 : vector<16x32xf32> to vector<2x8x32xf32>
    %11 = vector.extract_strided_slice %6 {offsets = [0, 32], sizes = [16, 32], strides = [1, 1]} : vector<16x96xf32> to vector<16x32xf32>
    %12 = vector.shape_cast %11 : vector<16x32xf32> to vector<2x8x32xf32>
    %13 = vector.extract_strided_slice %6 {offsets = [0, 64], sizes = [16, 32], strides = [1, 1]} : vector<16x96xf32> to vector<16x32xf32>
    %14 = vector.shape_cast %13 : vector<16x32xf32> to vector<2x8x32xf32>
    %cst_7 = arith.constant dense<0.000000e+00> : vector<2x8x8xf32>
    %15 = tpu.matmul %10, %12, %cst_7 {dimension_numbers = #tpu.dot_dimension_numbers<[2], [2], [1], [1], [0, 0, 0, 1, 1, 1], [0], [0]>} : vector<2x8x32xf32>, vector<2x8x32xf32>, vector<2x8x8xf32> -> vector<2x8x8xf32>
    %c0_8 = arith.constant 0 : index
    %c0_9 = arith.constant 0 : index
    %c0_10 = arith.constant 0 : index
    %16 = vector.load %arg2[%c0_8, %c0_9, %c0_10] : memref<2x1x8xf32, #tpu.memory_space<vmem>>, vector<2x1x8xf32>
    %cst_11 = arith.constant 1.000000e+00 : f32
    %17 = vector.broadcast %cst_11 : f32 to vector<2x1x8xf32>
    %18 = arith.subf %16, %17 : vector<2x1x8xf32>
    %cst_12 = arith.constant 1.000000e+09 : f32
    %19 = vector.broadcast %cst_12 : f32 to vector<2x1x8xf32>
    %20 = arith.mulf %18, %19 : vector<2x1x8xf32>
    %21 = vector.broadcast %20 : vector<2x1x8xf32> to vector<2x8x8xf32>
    %22 = arith.addf %15, %21 : vector<2x8x8xf32>
    %cst_13 = arith.constant dense<0xFF800000> : vector<2x8xf32>
    %23 = vector.multi_reduction <maximumf>, %22, %cst_13 [2] : vector<2x8x8xf32> to vector<2x8xf32>
    %24 = vector.shape_cast %23 : vector<2x8xf32> to vector<2x8x1xf32>
    %25 = vector.broadcast %24 : vector<2x8x1xf32> to vector<2x8x8xf32>
    %26 = arith.subf %22, %25 : vector<2x8x8xf32>
    %27 = math.exp %26 : vector<2x8x8xf32>
    %cst_14 = arith.constant dense<0.000000e+00> : vector<2x8xf32>
    %28 = vector.multi_reduction <add>, %27, %cst_14 [2] : vector<2x8x8xf32> to vector<2x8xf32>
    %29 = vector.shape_cast %28 : vector<2x8xf32> to vector<2x8x1xf32>
    %30 = tpu.reciprocal %29 {approx = true} : vector<2x8x1xf32> -> vector<2x8x1xf32>
    %31 = vector.broadcast %30 : vector<2x8x1xf32> to vector<2x8x8xf32>
    %32 = arith.mulf %27, %31 : vector<2x8x8xf32>
    %33 = arith.truncf %32 : vector<2x8x8xf32> to vector<2x8x8xbf16>
    %34 = arith.truncf %14 : vector<2x8x32xf32> to vector<2x8x32xbf16>
    "tpu.trace_start"() <{level = 10 : i32, message = "bqk,bkd->bqd"}> : () -> ()
    %cst_15 = arith.constant dense<0.000000e+00> : vector<2x8x32xf32>
    %35 = tpu.matmul %33, %34, %cst_15 {dimension_numbers = #tpu.dot_dimension_numbers<[2], [1], [1], [2], [0, 0, 0, 1, 1, 2], [0], [0]>} : vector<2x8x8xbf16>, vector<2x8x32xbf16>, vector<2x8x32xf32> -> vector<2x8x32xf32>
    "tpu.trace_stop"() : () -> ()
    %c0_16 = arith.constant 0 : index
    %c0_17 = arith.constant 0 : index
    %c0_18 = arith.constant 0 : index
    %36 = vector.load %arg3[%c0_16, %c0_17, %c0_18] : memref<2x8x1xf32, #tpu.memory_space<vmem>>, vector<2x8x1xf32>
    %37 = vector.broadcast %36 : vector<2x8x1xf32> to vector<2x8x32xf32>
    %38 = arith.mulf %35, %37 : vector<2x8x32xf32>
    %c0_19 = arith.constant 0 : index
    %c0_20 = arith.constant 0 : index
    %c0_21 = arith.constant 0 : index
    %39 = vector.load %arg6[%c0_19, %c0_20, %c0_21] : memref<2x8x32xf32, #tpu.memory_space<vmem>>, vector<2x8x32xf32>
    tpu.vector_store %arg6[%c0_19, %c0_20, %c0_21], %38 {strides = array<i32>} : memref<2x8x32xf32, #tpu.memory_space<vmem>>, vector<2x8x32xf32>,
    return
  }
  func.func @transform_0(%arg0: i32) -> (i32, i32, i32) {
    %c0_i32 = arith.constant 0 : i32
    %c0_i32_0 = arith.constant 0 : i32
    %c0_i32_1 = arith.constant 0 : i32
    return %arg0, %c0_i32, %c0_i32_0 : i32, i32, i32
  }
  func.func @transform_1(%arg0: i32) -> (i32, i32, i32) {
    %c0_i32 = arith.constant 0 : i32
    %c0_i32_0 = arith.constant 0 : i32
    %c0_i32_1 = arith.constant 0 : i32
    return %arg0, %c0_i32, %c0_i32_0 : i32, i32, i32
  }
  func.func @transform_2(%arg0: i32) -> (i32, i32, i32) {
    %c0_i32 = arith.constant 0 : i32
    %c0_i32_0 = arith.constant 0 : i32
    %c0_i32_1 = arith.constant 0 : i32
    return %arg0, %c0_i32, %c0_i32_0 : i32, i32, i32
  }
  func.func @transform_3(%arg0: i32) -> (i32, i32) {
    %c0_i32 = arith.constant 0 : i32
    %c0_i32_0 = arith.constant 0 : i32
    %c0_i32_1 = arith.constant 0 : i32
    return %c0_i32, %c0_i32_0 : i32, i32
  }
  func.func @transform_4(%arg0: i32) -> (i32, i32) {
    %c0_i32 = arith.constant 0 : i32
    %c0_i32_0 = arith.constant 0 : i32
    %c0_i32_1 = arith.constant 0 : i32
    return %c0_i32, %c0_i32_0 : i32, i32
  }
  func.func @transform_5(%arg0: i32) -> (i32, i32, i32) {
    %c0_i32 = arith.constant 0 : i32
    %c0_i32_0 = arith.constant 0 : i32
    %c0_i32_1 = arith.constant 0 : i32
    return %arg0, %c0_i32, %c0_i32_0 : i32, i32, i32
  }
}

</mosaic_0001>

<llo_original>
// kernel: tpu_custom_call.1
$region0: #{tpu_custom_call.1}
  #allocation0 [shape = 'u32[]', space=smem, size = 0x4, offset = 0x4, fixed_abs, tag = 'smem constant byte address 0x4 - core index']
  #allocation1 [shape = 'u32[72,128]{1,0:T(1,128)}', space=vmem, size = 0x9000, scoped, tag = 'internal scratch']
  %s0 = inlined_call_operand.hbm [shape: bf16[2,8,32], index: 0, kind: input, shape index: {}]
  %s1 = inlined_call_operand.vmem [shape: f32[2,1,8], index: 1, kind: input, shape index: {}]
  %s2 = inlined_call_operand.vmem [shape: f32[2,8,1], index: 2, kind: input, shape index: {}]
  %s3 = inlined_call_operand.vmem [shape: bf16[32,96], index: 3, kind: input, shape index: {}]
  %s4 = inlined_call_operand.vmem [shape: f32[1,96], index: 4, kind: input, shape index: {}]
  %s5 = inlined_call_operand.hbm [shape: f32[2,8,32], index: 5, kind: output, shape index: {}]
  %s6 = sld [smem:[#allocation0]]
  $region34: #{tpu_custom_call.1} parent=0
    _
  %s8 = ssub.s32 1, %s6
  %s9 = scalar_select 0, %s8, %s6
  $region1: #{tpu_custom_call.1} parent=0
    #allocation2 [shape = 'u8[4096]{0}', space=vmem, size = 0x1000, scoped, tag = 'input window, operand 0, single buffered']
    #allocation3 [shape = 's32[1]{0}', space=sflag, size = 0x4, scoped, tag = 'scoped memory for tpu_custom_call.1']
    #allocation4 [shape = 's32[1]{0}', space=sflag, size = 0x4, scoped, tag = 'scoped memory for tpu_custom_call.1']
    #allocation5 [shape = 'u8[8192]{0}', space=vmem, size = 0x2000, scoped, tag = 'output window, operand 0, single buffered']
    %10 = vsyncpa [#allocation3], 0
    %11 = vsyncpa [#allocation4], 0
    // Predicated region
    $region2: #{tpu_custom_call.1} parent=1 // pred_check
      _
    $region3: #{tpu_custom_call.1} parent=1 // pred_check_branch
      %13 = sbr.rel (0) target = $region5
    $region4: #{tpu_custom_call.1} parent=1 // pred_region
      %15 = vsyncadd [#allocation3], 0
      %s16 = sshll.u32 %s0, 4
      %s17 = int_to_ptr.hbm [resolvable:$true] %s16
      %s18 = sshll.u32 [#allocation2], 4
      %s19 = int_to_ptr.vmem [resolvable:$true] %s18
      %24 = dma.hbm_to_vmem [thread:$0]  %s17, 128, %s19, [#allocation3], 64, 64, 4
    $region5: #{tpu_custom_call.1} parent=1 // pred_fallthru
      _
    // Predicated region
    $region6: #{tpu_custom_call.1} parent=1 // pred_check
      _
    $region7: #{tpu_custom_call.1} parent=1 // pred_check_branch
      %26 = sbr.rel (0) target = $region9
    $region8: #{tpu_custom_call.1} parent=1 // pred_region
      _
    $region9: #{tpu_custom_call.1} parent=1 // pred_fallthru
      _
    // Predicated region
    $region10: #{tpu_custom_call.1} parent=1 // pred_check
      _
    $region11: #{tpu_custom_call.1} parent=1 // pred_check_branch
      %28 = sbr.rel (0) target = $region13
    $region12: #{tpu_custom_call.1} parent=1 // pred_region
      _
    $region13: #{tpu_custom_call.1} parent=1 // pred_fallthru
      _
    // Predicated region
    $region14: #{tpu_custom_call.1} parent=1 // pred_check
      _
    $region15: #{tpu_custom_call.1} parent=1 // pred_check_branch
      %30 = sbr.rel (0) target = $region17
    $region16: #{tpu_custom_call.1} parent=1 // pred_region
      _
    $region17: #{tpu_custom_call.1} parent=1 // pred_fallthru
      _
    // Predicated region
    $region18: #{tpu_custom_call.1} parent=1 // pred_check
      _
    $region19: #{tpu_custom_call.1} parent=1 // pred_check_branch
      %32 = sbr.rel (0) target = $region21
    $region20: #{tpu_custom_call.1} parent=1 // pred_region
      _
    $region21: #{tpu_custom_call.1} parent=1 // pred_fallthru
      _
    // Predicated region
    $region22: #{tpu_custom_call.1} parent=1 // pred_check
      _
    $region23: #{tpu_custom_call.1} parent=1 // pred_check_branch
      %34 = sbr.rel (0) target = $region25
    $region24: #{tpu_custom_call.1} parent=1 // pred_region
      %36 = dma.done [#allocation3], 128
    $region25: #{tpu_custom_call.1} parent=1 // pred_fallthru
      _
    %v38 = vld [vmem:[#allocation2] sm:$0xf]
    %v39 = vld [vmem:[#allocation2 + $0x4] sm:$0xf]
    %v40 = vld [vmem:[%s3] sm:$0xf]
    %v41 = vld [vmem:[%s3 + $0x4] sm:$0xf]
    %v42 = vld [vmem:[%s3 + $0x8] sm:$0xf]
    %v43 = vld [vmem:[%s3 + $0xc] sm:$0xf]
    %v44 = vld [vmem:[%s4] sm:$0x1]
    %v46 = vperm.slane %v44, 0
    %v50 = vunpack.c.l.b16 %v38
    %v51 = vunpack.c.l.b16 %v39
    %v52 = vpack.c.b16 %v51, %v50
    %v57 = vunpack.c.l.b16 %v40
    %v58 = vunpack.c.l.b16 %v41
    %v59 = vunpack.c.l.b16 %v42
    %v60 = vunpack.c.l.b16 %v43
    %v61 = vpack.c.b16 %v58, %v57
    %v62 = vpack.c.b16 %v60, %v59
    %vm65 = vcmask 261120
    %v67 = vsel %vm65, %v52, 0
    %69 = vmatpush.bf16.msra.mxu0 0
    %70 = vmatpush.bf16.msra.mxu0 0
    %71 = vmatpush.bf16.msra.mxu0 0
    %72 = vmatpush.bf16.msra.mxu0 0
    %73 = vmatpush.bf16.msra.mxu0 0
    %74 = vmatpush.bf16.msra.mxu0 0
    %75 = vmatpush.bf16.msra.mxu0 %v62
    %76 = vmatpush.bf16.msra.mxu0 %v61
    %77 = vmatmul.bf16.gmra.mxu0 %v67
    %v78 = vpop.f32.mrf.mxu0
    %v79 = vadd.f32 %v46, %v78
    %v80 = vpop.f32.mrf.mxu0
    %v81 = vadd.f32 %v46, %v80
    %82 = vdwg.mxu0
    %v83 = vmul.f32 %v79, 0.17677669
    %v84 = vmul.f32 %v81, 0.17677669
    %v85 = vld [vmem:[%s1] sm:$0x1]
    %v86 = vld [vmem:[%s1 + $0x1] sm:$0x1]
    %v87 = vsub.f32 %v85, 1.0
    %v88 = vsub.f32 %v86, 1.0
    %v89 = vmul.f32 %v87, 1e+09
    %v90 = vmul.f32 %v88, 1e+09
    %v93 = vperm.slane %v89, 0
    %v94 = vperm.slane %v90, 0
    %98 = vrot.lane.b32.xlu0 %v79, 96
    %v99 = vpop.permute.xlu0 %98
    %v101 = vsel %vm65, %v83, 0
    %v103 = vsel %vm65, %v99, 0
    %105 = vmatpush.xpose.msra.mxu0 0.0
    %106 = vmatpush.xpose.msra.mxu0 0.0
    %107 = vmatpush.xpose.msra.mxu0 0.0
    %108 = vmatpush.xpose.msra.mxu0 0.0
    %109 = vmatpush.xpose.msra.mxu0 0.0
    %110 = vmatpush.xpose.msra.mxu0 0.0
    %111 = vmatpush.xpose.msra.mxu0 0.0
    %112 = vmatpush.xpose.msra.mxu0 0.0
    %113 = vmatpush.xpose.msra.mxu0 0.0
    %114 = vmatpush.xpose.msra.mxu0 0.0
    %115 = vmatpush.xpose.msra.mxu0 0.0
    %116 = vmatpush.xpose.msra.mxu0 0.0
    %117 = vmatpush.xpose.msra.mxu0 0.0
    %118 = vmatpush.xpose.msra.mxu0 0.0
    %119 = vmatpush.xpose.msra.mxu0 0.0
    %120 = vmatpush.xpose.msra.mxu0 %v103
    %121 = vmatmul.f32.gmra.mxu0 %v101
    %v122 = vpop.f32.mrf.mxu0
    %v123 = vadd.f32 %v93, %v122
    %124 = vdwg.mxu0
    %126 = vrot.lane.b32.xlu0 %v81, 96
    %v127 = vpop.permute.xlu0 %126
    %v129 = vsel %vm65, %v84, 0
    %v131 = vsel %vm65, %v127, 0
    %133 = vmatpush.xpose.msra.mxu0 0.0
    %134 = vmatpush.xpose.msra.mxu0 0.0
    %135 = vmatpush.xpose.msra.mxu0 0.0
    %136 = vmatpush.xpose.msra.mxu0 0.0
    %137 = vmatpush.xpose.msra.mxu0 0.0
    %138 = vmatpush.xpose.msra.mxu0 0.0
    %139 = vmatpush.xpose.msra.mxu0 0.0
    %140 = vmatpush.xpose.msra.mxu0 0.0
    %141 = vmatpush.xpose.msra.mxu0 0.0
    %142 = vmatpush.xpose.msra.mxu0 0.0
    %143 = vmatpush.xpose.msra.mxu0 0.0
    %144 = vmatpush.xpose.msra.mxu0 0.0
    %145 = vmatpush.xpose.msra.mxu0 0.0
    %146 = vmatpush.xpose.msra.mxu0 0.0
    %147 = vmatpush.xpose.msra.mxu0 0.0
    %148 = vmatpush.xpose.msra.mxu0 %v131
    %149 = vmatmul.f32.gmra.mxu0 %v129
    %v150 = vpop.f32.mrf.mxu0
    %v151 = vadd.f32 %v94, %v150
    %152 = vdwg.mxu0
    %vm153 = vcmask 64512
    %v154 = vsel %vm153, %v123, -inf
    %155 = vmax.xlane.f32.xlu0 %v154
    %v156 = vpop.xlane.xlu0 %155
    %v157 = vsel %vm153, %v151, -inf
    %158 = vmax.xlane.f32.xlu0 %v157
    %v159 = vpop.xlane.xlu0 %158
    %v160 = vsub.f32 %v123, %v156
    %v161 = vsub.f32 %v151, %v159
    %v162 = vmul.f32 %v160, 1.442695
    %v163 = vpow.pop %v162
    %v164 = vmul.f32 %v161, 1.442695
    %v165 = vpow.pop %v164
    %v166 = vsel %vm153, %v163, 0.0
    %167 = vadd.xlane.f32.xlu0 %v166
    %v168 = vpop.xlane.xlu0 %167
    %v169 = vsel %vm153, %v165, 0.0
    %170 = vadd.xlane.f32.xlu0 %v169
    %v171 = vpop.xlane.xlu0 %170
    %v172 = vrcp.pop %v168
    %v173 = vrcp.pop %v171
    %v174 = vmul.f32 %v163, %v172
    %v175 = vmul.f32 %v165, %v173
    %v176 = vpack.c.bf16 %v174, %v174
    %v177 = vpack.c.bf16 %v175, %v175
    %v178 = vpack.c.bf16 %v79, %v79
    %v179 = vpack.c.bf16 %v81, %v81
    %v181 = vunpack.c.l.b16 %v178
    %v182 = vpack.c.b16 %v181, %v181
    %183 = vrot.lane.b32.xlu0 %v182, 64
    %v184 = vpop.permute.xlu0 %183
    %v186 = vsel %vm153, %v176, 0
    %vm188 = vcmask 1043456
    %v190 = vsel %vm188, %v184, 0
    %192 = vmatpush.bf16.msra.mxu0 0
    %193 = vmatpush.bf16.msra.mxu0 0
    %194 = vmatpush.bf16.msra.mxu0 0
    %195 = vmatpush.bf16.msra.mxu0 0
    %196 = vmatpush.bf16.msra.mxu0 0
    %197 = vmatpush.bf16.msra.mxu0 0
    %198 = vmatpush.bf16.msra.mxu0 0
    %199 = vmatpush.bf16.msra.mxu0 %v190
    %200 = vmatmul.bf16.gmra.mxu0 %v186
    %v201 = vpop.f32.mrf.mxu0
    %v202 = vadd.f32 0.0, %v201
    %v203 = vpop.f32.mrf.mxu0
    %204 = vdwg.mxu0
    %v206 = vunpack.c.l.b16 %v179
    %v207 = vpack.c.b16 %v206, %v206
    %208 = vrot.lane.b32.xlu0 %v207, 64
    %v209 = vpop.permute.xlu0 %208
    %v211 = vsel %vm153, %v177, 0
    %v214 = vsel %vm188, %v209, 0
    %216 = vmatpush.bf16.msra.mxu0 0
    %217 = vmatpush.bf16.msra.mxu0 0
    %218 = vmatpush.bf16.msra.mxu0 0
    %219 = vmatpush.bf16.msra.mxu0 0
    %220 = vmatpush.bf16.msra.mxu0 0
    %221 = vmatpush.bf16.msra.mxu0 0
    %222 = vmatpush.bf16.msra.mxu0 0
    %223 = vmatpush.bf16.msra.mxu0 %v214
    %224 = vmatmul.bf16.gmra.mxu0 %v211
    %v225 = vpop.f32.mrf.mxu0
    %v226 = vadd.f32 0.0, %v225
    %v227 = vpop.f32.mrf.mxu0
    %228 = vdwg.mxu0
    %v229 = vld [vmem:[%s2] sm:$0xff]
    %v230 = vld [vmem:[%s2 + $0x8] sm:$0xff]
    %232 = vset.pattern.permute.xlu0 0
    %233 = vperm.xlu0 %232, %v229
    %v234 = vpop.permute.xlu0 %233
    %237 = vset.pattern.permute.xlu0 0
    %238 = vperm.xlu0 %237, %v230
    %v239 = vpop.permute.xlu0 %238
    %v241 = vmul.f32 %v202, %v234
    %v242 = vmul.f32 %v226, %v239
    %243 = vst.msk [vmem:[#allocation5] sm:$0xff] %vm65, %v241
    %244 = vst.msk [vmem:[#allocation5 + $0x8] sm:$0xff] %vm65, %v242
    // Predicated region
    $region26: #{tpu_custom_call.1} parent=1 // pred_check
      _
    $region27: #{tpu_custom_call.1} parent=1 // pred_check_branch
      %246 = sbr.rel (0) target = $region29
    $region28: #{tpu_custom_call.1} parent=1 // pred_region
      %248 = vsyncadd [#allocation4], 0
      %s249 = sshll.u32 [#allocation5], 4
      %s250 = int_to_ptr.vmem [resolvable:$true] %s249
      %s251 = sshll.u32 %s5, 4
      %s252 = int_to_ptr.hbm [resolvable:$true] %s251
      %257 = dma.vmem_to_hbm [thread:$0]  %s250, 256, %s252, [#allocation4], 128, 128, 8
    $region29: #{tpu_custom_call.1} parent=1 // pred_fallthru
      _
    // Predicated region
    $region30: #{tpu_custom_call.1} parent=1 // pred_check
      _
    $region31: #{tpu_custom_call.1} parent=1 // pred_check_branch
      %259 = sbr.rel (0) target = $region33
    $region32: #{tpu_custom_call.1} parent=1 // pred_region
      %261 = dma.done [#allocation4], 256
    $region33: #{tpu_custom_call.1} parent=1 // pred_fallthru
      _
    %262 = vsyncpa [#allocation3], 1
    %263 = vsyncpa [#allocation4], 1

</llo_original>
